<compile_context>
chip_gen: v7x
topology: tpu7x:2x2x1
jax: 0.10.0
libtpu: 0.0.40
codegen_flags: <defaults>
</compile_context>

<pallas_src>
import functools

import jax
import jax.numpy as jnp
from jax.experimental import pallas as pl
from jax.experimental.pallas import tpu as pltpu


_MIB = 1024 * 1024


def _round_up(x, m):
    return ((x + m - 1) // m) * m


def _vmem_capacity_bytes():
    try:
        return int(pltpu.get_tpu_info().vmem_capacity_bytes)
    except Exception:
        # Conservative fallback: assume a 128 MiB part.
        return 128 * _MIB


def _budget_and_limit(per_row_bytes):
    """Pick (tile byte budget, scoped vmem_limit_bytes) per TPU generation."""
    cap = _vmem_capacity_bytes()
    if cap <= 96 * _MIB:
        # v7x-class: 64 MiB VMEM per TensorCore. Small tile budget; leave
        # headroom for Mosaic internal scratch + the fp32 temporaries.
        return 16 * _MIB, 44 * _MIB
    # 128 MiB parts (v5e / v6e).
    budget, limit = 32 * _MIB, 64 * _MIB
    if budget // max(per_row_bytes, 1) < 256:
        # Very large H: bump the budget so tm stays >= 256 rows (still well
        # within 128 MiB physical VMEM).
        budget, limit = 56 * _MIB, 96 * _MIB
    return budget, limit


def _pick_tm(S, H, itemsizes, block_rows=None):
    """Row-tile size + vmem limit: VMEM-budgeted, pack-aligned, grid-depth aware."""
    pack = max(8, 32 // int(min(itemsizes)))          # 8 fp32 / 16 bf16 / 32 int8
    s_up = _round_up(S, pack)

    # Bytes of VMEM per row:
    #   * streamed (tm, H) tiles, double-buffered by the BlockSpec pipeline
    #   * plus ~8*H bytes of full-block fp32 intermediates (h32 + one fused temp)
    per_row = 2 * H * int(sum(itemsizes)) + 8 * H
    budget, vmem_limit = _budget_and_limit(per_row)

    if block_rows is not None:
        tm = max(pack, (int(block_rows) // pack) * pack)
        return min(tm, s_up), vmem_limit

    max_tm = 256 if H >= 8192 else 512
    tm = min(max(pack, budget // per_row), max_tm)

    # Prefer >=8 grid steps for DMA/compute overlap, but never shrink tiles
    # below 256 rows just for pipelining depth (roofline plateaus ~256-512).
    tm = min(tm, max(256, _round_up(pl.cdiv(S, 8), pack)))
    # Always allow at least 2 grid steps when S permits, so the "parallel"
    # grid axis can shard across v7x's two TensorCores.
    tm = min(tm, _round_up(pl.cdiv(S, 2), pack))

    tm = max(pack, (tm // pack) * pack)               # sublane-pack aligned
    return min(tm, s_up), vmem_limit


def _weight_is_half(weight):
    return weight.dtype in (jnp.dtype(jnp.float16), jnp.dtype(jnp.bfloat16))


def _rmsnorm_kernel(x_ref, w_ref, o_ref, *, eps, cast_before_mul):
    # No-residual variant: single (tm, H) input, single (tm, H) output.
    h32 = x_ref[...].astype(jnp.float32)
    var = jnp.mean(h32 * h32, axis=-1, keepdims=True)           # XLU reduce
    normed = h32 * jax.lax.rsqrt(var + eps)                     # EUP rsqrt
    w = w_ref[...]
    if cast_before_mul:
        out = w * normed.astype(w.dtype)
    else:
        out = w.astype(jnp.float32) * normed
    o_ref[...] = out.astype(o_ref.dtype)


def _rmsnorm_add_kernel(x_ref, r_ref, w_ref, o_ref, res_ref, *, eps, cast_before_mul):
    # Fused residual add (in the input dtype, matching torch `+=`), then RMSNorm.
    h = x_ref[...] + r_ref[...]
    res_ref[...] = h.astype(res_ref.dtype)
    h32 = h.astype(jnp.float32)
    var = jnp.mean(h32 * h32, axis=-1, keepdims=True)
    normed = h32 * jax.lax.rsqrt(var + eps)
    w = w_ref[...]
    if cast_before_mul:
        out = w * normed.astype(w.dtype)
    else:
        out = w.astype(jnp.float32) * normed
    o_ref[...] = out.astype(o_ref.dtype)


def qwen_rms_norm(hidden_states, weight, residual=None, eps=1e-6,
                  block_rows=None, low_precision_output=False):
    """hidden_states: (S, H); weight: (H,). Returns (normed, residual_out)."""
    S, H = hidden_states.shape
    w2d = weight.reshape(1, H)

    cast_before_mul = _weight_is_half(weight)
    if cast_before_mul:
        out_dtype = weight.dtype
    elif low_precision_output:
        # Optional traffic saver (bf16/fp16 activations + fp32 weight):
        # deviates from strict promote-to-fp32 semantics, hence gated.
        out_dtype = hidden_states.dtype
    else:
        out_dtype = jnp.promote_types(weight.dtype, jnp.float32)

    in_item = jnp.dtype(hidden_states.dtype).itemsize
    out_item = jnp.dtype(out_dtype).itemsize

    if residual is None:
        # No zeros materialization, no redundant res_out writeback.
        tm, vmem_limit = _pick_tm(S, H, (in_item, out_item), block_rows)
        grid = (pl.cdiv(S, tm),)
        kernel = functools.partial(
            _rmsnorm_kernel, eps=eps, cast_before_mul=cast_before_mul)
        normed = pl.pallas_call(
            kernel,
            out_shape=jax.ShapeDtypeStruct((S, H), out_dtype),
            grid_spec=pltpu.PrefetchScalarGridSpec(
                num_scalar_prefetch=0,
                grid=grid,
                in_specs=[
                    pl.BlockSpec((tm, H), lambda i: (i, 0)),
                    pl.BlockSpec((1, H), lambda i: (0, 0)),
                ],
                out_specs=pl.BlockSpec((tm, H), lambda i: (i, 0)),
            ),
            compiler_params=pltpu.CompilerParams(
                dimension_semantics=("parallel",),
                vmem_limit_bytes=vmem_limit,
            ),
        )(hidden_states, w2d)
        # res_out == hidden_states bit-for-bit; skip the extra (S, H) HBM write.
        return normed, hidden_states

    r_item = jnp.dtype(residual.dtype).itemsize
    tm, vmem_limit = _pick_tm(S, H, (in_item, r_item, out_item, in_item), block_rows)
    grid = (pl.cdiv(S, tm),)
    kernel = functools.partial(
        _rmsnorm_add_kernel, eps=eps, cast_before_mul=cast_before_mul)

    # res_out (= x + residual) reuses the residual HBM buffer. NOTE: only a
    # true in-place update if the caller donates `residual` at the jit
    # boundary; otherwise XLA inserts a defensive copy (correct, slower).
    io_aliases = {1: 1} if residual.dtype == hidden_states.dtype else {}

    normed, res_out = pl.pallas_call(
        kernel,
        out_shape=(
            jax.ShapeDtypeStruct((S, H), out_dtype),
            jax.ShapeDtypeStruct((S, H), hidden_states.dtype),
        ),
        grid_spec=pltpu.PrefetchScalarGridSpec(
            num_scalar_prefetch=0,
            grid=grid,
            in_specs=[
                pl.BlockSpec((tm, H), lambda i: (i, 0)),
                pl.BlockSpec((tm, H), lambda i: (i, 0)),
                pl.BlockSpec((1, H), lambda i: (0, 0)),
            ],
            out_specs=[
                pl.BlockSpec((tm, H), lambda i: (i, 0)),
                pl.BlockSpec((tm, H), lambda i: (i, 0)),
            ],
        ),
        input_output_aliases=io_aliases,
        compiler_params=pltpu.CompilerParams(
            dimension_semantics=("parallel",),
            vmem_limit_bytes=vmem_limit,
        ),
    )(hidden_states, residual, w2d)
    return normed, res_out


def _reference(hidden_states, weight, residual=None, eps=1e-6):
    h = hidden_states if residual is None else hidden_states + residual
    res = h
    h32 = h.astype(jnp.float32)
    var = jnp.mean(h32 * h32, axis=-1, keepdims=True)
    normed = h32 * jax.lax.rsqrt(var + eps)
    if _weight_is_half(weight):
        out = weight * normed.astype(weight.dtype)
    else:
        out = weight.astype(jnp.float32) * normed
    return out, res


if __name__ == "__main__":
    key = jax.random.PRNGKey(0)
    k1, k2, k3 = jax.random.split(key, 3)
    eps = 1e-6

    # ---- Case 1 & 2: fp32 activations + fp32 weight, small shapes ----
    S, H = 16, 256
    x = jax.random.normal(k1, (S, H), dtype=jnp.float32)
    resid = jax.random.normal(k2, (S, H), dtype=jnp.float32)
    weight = 1.0 + 0.02 * jax.random.normal(k3, (H,), dtype=jnp.float32)

    out1, res1 = qwen_rms_norm(x, weight, residual=None, eps=eps)
    out2, res2 = qwen_rms_norm(x, weight, residual=resid, eps=eps)
    jax.block_until_ready((out1, res1, out2, res2))

    ref_out1, ref_res1 = _reference(x, weight, None, eps)
    ref_out2, ref_res2 = _reference(x, weight, resid, eps)

    assert out1.dtype == ref_out1.dtype and res1.dtype == ref_res1.dtype
    assert out2.dtype == ref_out2.dtype and res2.dtype == ref_res2.dtype
    assert jnp.allclose(out1, ref_out1, atol=1e-5, rtol=1e-5)
    assert jnp.array_equal(res1, ref_res1)          # returned input directly
    assert jnp.allclose(out2, ref_out2, atol=1e-5, rtol=1e-5)
    assert jnp.allclose(res2, ref_res2, atol=1e-6, rtol=1e-6)

    # ---- Case 3: bf16 activations + bf16 weight, ragged S (partial tail block) ----
    S3, H3 = 48, 256
    x3 = jax.random.normal(k1, (S3, H3), dtype=jnp.float32).astype(jnp.bfloat16)
    r3 = jax.random.normal(k2, (S3, H3), dtype=jnp.float32).astype(jnp.bfloat16)
    w3 = (1.0 + 0.02 * jax.random.normal(k3, (H3,), dtype=jnp.float32)).astype(jnp.bfloat16)

    # block_rows=32 forces a partial last block (rows 32..47) at small scale.
    out3, res3 = qwen_rms_norm(x3, w3, residual=r3, eps=eps, block_rows=32)
    jax.block_until_ready((out3, res3))
    ref_out3, ref_res3 = _reference(x3, w3, r3, eps)

    assert out3.dtype == ref_out3.dtype == jnp.bfloat16
    assert res3.dtype == jnp.bfloat16
    assert jnp.allclose(out3.astype(jnp.float32), ref_out3.astype(jnp.float32),
                        atol=2e-2, rtol=2e-2)
    assert jnp.allclose(res3.astype(jnp.float32), ref_res3.astype(jnp.float32),
                        atol=2e-2, rtol=2e-2)

    print("KERNEL_OK")
</pallas_src>

<mosaic_0001>
module attributes {stable_mosaic.version = 11 : i64} {
  func.func @_rmsnorm_kernel(%arg0: i32, %arg1: memref<8x256xf32, #tpu.memory_space<vmem>>, %arg2: memref<1x256xf32, #tpu.memory_space<vmem>>, %arg3: memref<8x256xf32, #tpu.memory_space<vmem>>) attributes {dimension_semantics = [#tpu.dimension_semantics<parallel>], iteration_bounds = array<i64: 2>, scalar_prefetch = 0 : i64, scratch_operands = 0 : i64, tpu.core_type = #tpu.core_type<tc>, window_params = [{transform_indices = @transform_0, window_bounds = array<i64: 8, 256>}, {pipeline_mode = #tpu.pipeline_mode<synchronous>, transform_indices = @transform_1, window_bounds = array<i64: 1, 256>}, {transform_indices = @transform_2, window_bounds = array<i64: 8, 256>}]} {
    %c0 = arith.constant 0 : index
    %c0_0 = arith.constant 0 : index
    %0 = vector.load %arg1[%c0, %c0_0] : memref<8x256xf32, #tpu.memory_space<vmem>>, vector<8x256xf32>
    %1 = arith.mulf %0, %0 : vector<8x256xf32>
    %cst = arith.constant dense<0.000000e+00> : vector<8xf32>
    %2 = vector.multi_reduction <add>, %1, %cst [1] : vector<8x256xf32> to vector<8xf32>
    %3 = vector.shape_cast %2 : vector<8xf32> to vector<8x1xf32>
    %cst_1 = arith.constant 2.560000e+02 : f32
    %4 = vector.broadcast %cst_1 : f32 to vector<8x1xf32>
    %5 = arith.divf %3, %4 : vector<8x1xf32>
    %cst_2 = arith.constant 9.99999997E-7 : f32
    %6 = vector.broadcast %cst_2 : f32 to vector<8x1xf32>
    %7 = arith.addf %5, %6 : vector<8x1xf32>
    %8 = math.rsqrt %7 : vector<8x1xf32>
    %9 = vector.broadcast %8 : vector<8x1xf32> to vector<8x256xf32>
    %10 = arith.mulf %0, %9 : vector<8x256xf32>
    %c0_3 = arith.constant 0 : index
    %c0_4 = arith.constant 0 : index
    %11 = vector.load %arg2[%c0_3, %c0_4] : memref<1x256xf32, #tpu.memory_space<vmem>>, vector<1x256xf32>
    %12 = vector.broadcast %11 : vector<1x256xf32> to vector<8x256xf32>
    %13 = arith.mulf %12, %10 : vector<8x256xf32>
    %c0_5 = arith.constant 0 : index
    %c0_6 = arith.constant 0 : index
    %14 = vector.load %arg3[%c0_5, %c0_6] : memref<8x256xf32, #tpu.memory_space<vmem>>, vector<8x256xf32>
    tpu.vector_store %arg3[%c0_5, %c0_6], %13 {strides = array<i32>} : memref<8x256xf32, #tpu.memory_space<vmem>>, vector<8x256xf32>,
    return
  }
  func.func @transform_0(%arg0: i32) -> (i32, i32) {
    %c0_i32 = arith.constant 0 : i32
    %c0_i32_0 = arith.constant 0 : i32
    return %arg0, %c0_i32 : i32, i32
  }
  func.func @transform_1(%arg0: i32) -> (i32, i32) {
    %c0_i32 = arith.constant 0 : i32
    %c0_i32_0 = arith.constant 0 : i32
    %c0_i32_1 = arith.constant 0 : i32
    return %c0_i32, %c0_i32_0 : i32, i32
  }
  func.func @transform_2(%arg0: i32) -> (i32, i32) {
    %c0_i32 = arith.constant 0 : i32
    %c0_i32_0 = arith.constant 0 : i32
    return %arg0, %c0_i32 : i32, i32
  }
}

</mosaic_0001>

<llo_original>
// kernel: tpu_custom_call.1
$region0: #{tpu_custom_call.1}
  #allocation0 [shape = 'u32[]', space=smem, size = 0x4, offset = 0x4, fixed_abs, tag = 'smem constant byte address 0x4 - core index']
  #allocation1 [shape = 'u32[144,128]{1,0:T(1,128)}', space=vmem, size = 0x12000, scoped, tag = 'internal scratch']
  %s0 = inlined_call_operand.hbm [shape: f32[16,256], index: 0, kind: input, shape index: {}]
  %s1 = inlined_call_operand.hbm [shape: f32[1,256], index: 1, kind: input, shape index: {}]
  %s2 = inlined_call_operand.hbm [shape: f32[16,256], index: 2, kind: output, shape index: {}]
  %s3 = sld [smem:[#allocation0]]
  $region49: #{tpu_custom_call.1} parent=0
    _
  %s5 = ssub.s32 1, %s3
  %s6 = scalar_select 0, %s5, %s3
  $region1: #{tpu_custom_call.1} parent=0
    #allocation2 [shape = 'u8[16384]{0}', space=vmem, size = 0x4000, scoped, tag = 'input window, operand 0']
    #allocation3 [shape = 's32[2]{0}', space=sflag, size = 0x8, scoped, tag = 'scoped memory for tpu_custom_call.1']
    #allocation4 [shape = 's32[2]{0}', space=sflag, size = 0x8, scoped, tag = 'scoped memory for tpu_custom_call.1']
    #allocation5 [shape = 'u8[1024]{0}', space=vmem, size = 0x400, scoped, tag = 'input window, operand 1, single buffered']
    #allocation6 [shape = 's32[1]{0}', space=sflag, size = 0x4, scoped, tag = 'scoped memory for tpu_custom_call.1']
    #allocation7 [shape = 'u8[16384]{0}', space=vmem, size = 0x4000, scoped, tag = 'output window, operand 0']
    %7 = vsyncpa [#allocation3], 0
    %s8 = scalar_lea.sflag [#allocation3], 1
    %9 = vsyncpa %s8, 0
    %10 = vsyncpa [#allocation6], 0
    %11 = vsyncpa [#allocation4], 0
    %s12 = scalar_lea.sflag [#allocation4], 1
    %13 = vsyncpa %s12, 0
    loop: start=0, step=1, limit=4
    $region2: #{tpu_custom_call.1} parent=1 // loop_pre_header
      _
    $region3: #{tpu_custom_call.1} parent=1 // loop_header
      %s15 = sphi 0, %s19
      %p16 = scmp.ge.s32.totalorder %s15, 4
      %s25 = sphi 0, %s27
      %s28 = sphi 0, %s25
      %s29 = sphi 0, %s28
      %s45 = sphi 0, %s29
      %s49 = sphi 0, %s49
      %s51 = sphi 0, %s49
      %s52 = sphi 0, %s51
      %s66 = sphi 0, %s52
      %s72 = sphi 0, %s74
      %s75 = sphi 0, %s72
      %s76 = sphi 0, %s75
      %s92 = sphi 0, %s76
    $region4: #{tpu_custom_call.1} parent=1 // loop_header_branch
      %18 = sbr.rel (%p16) target = $region8
    $region5: #{tpu_custom_call.1} parent=1 // loop_body
      %s20 = ssub.s32 %s15, 1
      %s21 = ssub.s32 %s15, 2
      %s22 = sadd.s32 %s15, 1
      %s23 = ssub.s32 %s15, %s22
      %p24 = scmp.eq.s32.totalorder %s23, 0
      %s26 = sadd.s32 %s25, 1
      %s27 = scalar_select %p24, %s25, %s26
      %p30 = pneg %p24
      %p31 = scmp.eq.s32.totalorder %s15, 1
      %p32 = por %p30, %p31
      %p33 = scmp.ne.s32.totalorder %s25, %s28
      %p34 = scmp.eq.s32.totalorder %s15, 0
      %p35 = por %p33, %p34
      %p36 = scmp.ne.s32.totalorder %s25, %s28
      %p37 = scmp.eq.s32.totalorder %s20, 1
      %p38 = por %p36, %p37
      %p39 = scmp.ne.s32.totalorder %s28, %s29
      %p40 = scmp.eq.s32.totalorder %s20, 0
      %p41 = por %p39, %p40
      %p42 = scmp.ne.s32.totalorder %s28, %s29
      %p43 = scmp.eq.s32.totalorder %s21, 1
      %p44 = por %p42, %p43
      %p46 = scmp.ne.s32.totalorder %s29, %s45
      %p47 = scmp.eq.s32.totalorder %s21, 0
      %p48 = por %p46, %p47
      %s50 = sadd.s32 %s49, 1
      %p53 = scmp.eq.s32.totalorder %s15, 1
      %p54 = scmp.ne.s32.totalorder %s49, %s51
      %p55 = scmp.eq.s32.totalorder %s15, 0
      %p56 = por %p54, %p55
      %p57 = scmp.ne.s32.totalorder %s49, %s51
      %p58 = scmp.eq.s32.totalorder %s20, 1
      %p59 = por %p57, %p58
      %p60 = scmp.ne.s32.totalorder %s51, %s52
      %p61 = scmp.eq.s32.totalorder %s20, 0
      %p62 = por %p60, %p61
      %p63 = scmp.ne.s32.totalorder %s51, %s52
      %p64 = scmp.eq.s32.totalorder %s21, 1
      %p65 = por %p63, %p64
      %p67 = scmp.ne.s32.totalorder %s52, %s66
      %p68 = scmp.eq.s32.totalorder %s21, 0
      %p69 = por %p67, %p68
      %s70 = ssub.s32 %s15, %s22
      %p71 = scmp.eq.s32.totalorder %s70, 0
      %s73 = sadd.s32 %s72, 1
      %s74 = scalar_select %p71, %s72, %s73
      %p77 = pneg %p71
      %p78 = scmp.eq.s32.totalorder %s15, 1
      %p79 = por %p77, %p78
      %p80 = scmp.ne.s32.totalorder %s72, %s75
      %p81 = scmp.eq.s32.totalorder %s15, 0
      %p82 = por %p80, %p81
      %p83 = scmp.ne.s32.totalorder %s72, %s75
      %p84 = scmp.eq.s32.totalorder %s20, 1
      %p85 = por %p83, %p84
      %p86 = scmp.ne.s32.totalorder %s75, %s76
      %p87 = scmp.eq.s32.totalorder %s20, 0
      %p88 = por %p86, %p87
      %p89 = scmp.ne.s32.totalorder %s75, %s76
      %p90 = scmp.eq.s32.totalorder %s21, 1
      %p91 = por %p89, %p90
      %p93 = scmp.ne.s32.totalorder %s76, %s92
      %p94 = scmp.eq.s32.totalorder %s21, 0
      %p95 = por %p93, %p94
      %p96 = scmp.le.s32.totalorder 1, %s15
      %p97 = scmp.lt.s32.totalorder %s15, 3
      %p98 = pnand %p96, %p97
      %p99 = pneg %p98
      // Predicated region
      $region9: #{tpu_custom_call.1} parent=5 // pred_check
        _
      $region10: #{tpu_custom_call.1} parent=5 // pred_check_branch
        %101 = sbr.rel (%p98) target = $region12
      $region11: #{tpu_custom_call.1} parent=5 // pred_region
        %s102 = ssub.s32 %s15, 1
        // Predicated region
        $region13: #{tpu_custom_call.1} parent=11 // pred_check
          %p103 = pneg %p62
        $region14: #{tpu_custom_call.1} parent=11 // pred_check_branch
          %105 = sbr.rel (%p103) target = $region16
        $region15: #{tpu_custom_call.1} parent=11 // pred_region
          %s107 = ssub.s32 32, 32
          %108 = vsyncadd [#allocation6], %s107
          %s110 = sshll.u32 [#allocation5], 4
          %s111 = int_to_ptr.vmem [resolvable:$true] %s110
          %113 = dma.hbm_to_vmem [thread:$0]  %s1, 32, %s111, [#allocation6]
        $region16: #{tpu_custom_call.1} parent=11 // pred_fallthru
          _
      $region12: #{tpu_custom_call.1} parent=5 // pred_fallthru
        _
      %p114 = scmp.lt.s32.totalorder %s15, 2
      // Predicated region
      $region17: #{tpu_custom_call.1} parent=5 // pred_check
        %p115 = pneg %p114
      $region18: #{tpu_custom_call.1} parent=5 // pred_check_branch
        %117 = sbr.rel (%p115) target = $region20
      $region19: #{tpu_custom_call.1} parent=5 // pred_region
        // Predicated region
        $region21: #{tpu_custom_call.1} parent=19 // pred_check
          %p118 = pneg %p35
        $region22: #{tpu_custom_call.1} parent=19 // pred_check_branch
          %120 = sbr.rel (%p118) target = $region24
        $region23: #{tpu_custom_call.1} parent=19 // pred_region
          %s121 = sand.u32 %s25, 1
          %s122 = scalar_lea.sflag [#allocation3], %s121
          %s123 = sand.u32 %s25, 1
          %s124 = smul.addr %s123, 16
          %s125 = scalar_lea.vmem [#allocation2], %s124
          %s127 = ssub.s32 256, 256
          %128 = vsyncadd %s122, %s127
          %s129 = smul.addr %s15, 2
          %s130 = smul.addr %s129, 128
          %s131 = scalar_lea.hbm %s0, %s130
          %s133 = sshll.u32 %s125, 4
          %s134 = int_to_ptr.vmem [resolvable:$true] %s133
          %136 = dma.hbm_to_vmem [thread:$0]  %s131, 256, %s134, %s122
        $region24: #{tpu_custom_call.1} parent=19 // pred_fallthru
          _
      $region20: #{tpu_custom_call.1} parent=5 // pred_fallthru
        _
      %p137 = scmp.le.s32.totalorder 1, %s15
      %p138 = scmp.lt.s32.totalorder %s15, 3
      %p139 = pnand %p137, %p138
      %p140 = pneg %p139
      // Predicated region
      $region25: #{tpu_custom_call.1} parent=5 // pred_check
        _
      $region26: #{tpu_custom_call.1} parent=5 // pred_check_branch
        %142 = sbr.rel (%p139) target = $region28
      $region27: #{tpu_custom_call.1} parent=5 // pred_region
        %s143 = ssub.s32 %s15, 1
        %s144 = sand.u32 %s28, 1
        %s145 = scalar_lea.sflag [#allocation3], %s144
        %s146 = sand.u32 %s28, 1
        %s147 = smul.addr %s146, 16
        %s148 = scalar_lea.vmem [#allocation2], %s147
        // Predicated region
        $region29: #{tpu_custom_call.1} parent=27 // pred_check
          %p149 = pneg %p41
        $region30: #{tpu_custom_call.1} parent=27 // pred_check_branch
          %151 = sbr.rel (%p149) target = $region32
        $region31: #{tpu_custom_call.1} parent=27 // pred_region
          %152 = dma.done %s145, 256
        $region32: #{tpu_custom_call.1} parent=27 // pred_fallthru
          _
        // Predicated region
        $region33: #{tpu_custom_call.1} parent=27 // pred_check
          %p153 = pneg %p62
        $region34: #{tpu_custom_call.1} parent=27 // pred_check_branch
          %155 = sbr.rel (%p153) target = $region36
        $region35: #{tpu_custom_call.1} parent=27 // pred_region
          %156 = dma.done [#allocation6], 32
        $region36: #{tpu_custom_call.1} parent=27 // pred_fallthru
          _
        %s157 = sand.u32 %s28, 1
        %s158 = scalar_lea.sflag [#allocation3], %s157
        %s159 = sand.u32 %s28, 1
        %s160 = smul.addr %s159, 16
        %s161 = scalar_lea.vmem [#allocation2], %s160
        %p162 = pneg %p41
        %p163 = pneg %p38
        %p164 = pneg %p62
        %p165 = pneg %p59
        %p166 = pneg %p88
        %p167 = pneg %p85
        %s168 = sand.u32 %s75, 1
        %s169 = scalar_lea.sflag [#allocation4], %s168
        %s170 = sand.u32 %s75, 1
        %s171 = smul.addr %s170, 16
        %s172 = scalar_lea.vmem [#allocation7], %s171
        %v173 = vld [vmem:[%s148] sm:$0xff]
        %v174 = vld [vmem:[%s148 + $0x8] sm:$0xff]
        %v175 = vmul.f32 %v173, %v173
        %v176 = vmul.f32 %v174, %v174
        %v177 = vadd.f32 %v175, %v176
        %178 = vadd.xlane.f32.xlu0 %v177
        %v179 = vpop.xlane.xlu0 %178
        %v180 = vrcp.pop 256.0
        %v181 = vmul.f32 %v179, %v180
        %v182 = vadd.f32 %v181, 1e-06
        %v183 = vrsqrt.pop %v182
        %v184 = vmul.f32 %v173, %v183
        %v185 = vmul.f32 %v174, %v183
        %v186 = vld [vmem:[#allocation5] sm:$0x3]
        %v188 = vlaneseq
        %v189 = vshrl.u32 %v188, 7
        %v190 = vsub.s32 0, %v189
        %v191 = vrot.slane %v186, %v190
        %v192 = vlaneseq
        %v193 = vshrl.u32 %v192, 7
        %v194 = vsub.s32 1, %v193
        %v195 = vrot.slane %v186, %v194
        %v198 = vmul.f32 %v191, %v184
        %v199 = vmul.f32 %v195, %v185
        %200 = vst [vmem:[%s172] sm:$0xff] %v198
        %201 = vst [vmem:[%s172 + $0x8] sm:$0xff] %v199
        %s202 = sand.u32 %s75, 1
        %s203 = scalar_lea.sflag [#allocation4], %s202
        %s204 = sand.u32 %s75, 1
        %s205 = smul.addr %s204, 16
        %s206 = scalar_lea.vmem [#allocation7], %s205
        // Predicated region
        $region37: #{tpu_custom_call.1} parent=27 // pred_check
          %p207 = pneg %p85
        $region38: #{tpu_custom_call.1} parent=27 // pred_check_branch
          %209 = sbr.rel (%p207) target = $region40
        $region39: #{tpu_custom_call.1} parent=27 // pred_region
          %s211 = ssub.s32 256, 256
          %212 = vsyncadd %s203, %s211
          %s213 = smul.addr %s20, 2
          %s214 = smul.addr %s213, 128
          %s215 = scalar_lea.hbm %s2, %s214
          %s217 = sshll.u32 %s206, 4
          %s218 = int_to_ptr.vmem [resolvable:$true] %s217
          %220 = dma.vmem_to_hbm [thread:$0]  %s218, 256, %s215, %s203
        $region40: #{tpu_custom_call.1} parent=27 // pred_fallthru
          _
      $region28: #{tpu_custom_call.1} parent=5 // pred_fallthru
        _
      %p221 = scmp.le.s32.totalorder 2, %s15
      // Predicated region
      $region41: #{tpu_custom_call.1} parent=5 // pred_check
        %p222 = pneg %p221
      $region42: #{tpu_custom_call.1} parent=5 // pred_check_branch
        %224 = sbr.rel (%p222) target = $region44
      $region43: #{tpu_custom_call.1} parent=5 // pred_region
        %s225 = ssub.s32 %s15, 2
        // Predicated region
        $region45: #{tpu_custom_call.1} parent=43 // pred_check
          %p226 = pneg %p91
        $region46: #{tpu_custom_call.1} parent=43 // pred_check_branch
          %228 = sbr.rel (%p226) target = $region48
        $region47: #{tpu_custom_call.1} parent=43 // pred_region
          %s229 = sand.u32 %s76, 1
          %s230 = scalar_lea.sflag [#allocation4], %s229
          %s231 = sand.u32 %s76, 1
          %s232 = smul.addr %s231, 16
          %s233 = scalar_lea.vmem [#allocation7], %s232
          %234 = dma.done %s230, 256
        $region48: #{tpu_custom_call.1} parent=43 // pred_fallthru
          _
      $region44: #{tpu_custom_call.1} parent=5 // pred_fallthru
        _
    $region6: #{tpu_custom_call.1} parent=1 // loop_footer
      %s19 = sadd.s32 1, %s15
    $region7: #{tpu_custom_call.1} parent=1 // loop_footer_branch
      %14 = sbr.rel target = $region3
    $region8: #{tpu_custom_call.1} parent=1 // loop_exit
      _
    %235 = vsyncpa [#allocation3], 1
    %s236 = scalar_lea.sflag [#allocation3], 1
    %237 = vsyncpa %s236, 1
    %238 = vsyncpa [#allocation6], 1
    %239 = vsyncpa [#allocation4], 1
    %s240 = scalar_lea.sflag [#allocation4], 1
    %241 = vsyncpa %s240, 1

</llo_original>
